<compile_context>
chip_gen: v7x
topology: tpu7x:2x2x1
jax: 0.10.0
libtpu: 0.0.40
codegen_flags: <defaults>
</compile_context>

<pallas_src>
import functools
import math

import numpy as np
import jax
import jax.numpy as jnp
from jax.experimental import pallas as pl
from jax.experimental.pallas import tpu as pltpu


GELU_APPROX_TANH = False   # set True on v5e if the fc1 epilogue is VALU-bound (erf -> tanh/EUP)


# --------------------------- helpers -----------------------------------------

def _round_up(x, m):
    return (x + m - 1) // m * m


def _pad_rows(a, rows):
    if a.shape[0] == rows:
        return a
    return jnp.pad(a, ((0, rows - a.shape[0]), (0, 0)))


def _pick_row_tile(M):
    for t in (512, 256, 128):
        if M % t == 0:
            return t, M
    if M > 256:
        return 256, _round_up(M, 256)
    Mp = _round_up(M, 8)
    return Mp, Mp


# --------------------------- fused linear kernel ------------------------------

def _make_linear_kernel(has_ln, has_res, activation, eps, multi_k, use_ln_cache):
    """Kernel computing  o = act(LN(x) @ w + b) + residual  on one (tm, tn) tile.

    Grid is (M/tm, N/tn, K/tk). With multi_k, partial products accumulate into an f32 VMEM
    scratch; the epilogue (bias, GELU, residual, cast) runs on the last k step on acc + part.
    With LN fusion (tk == K), the normalized row block is cached in a bf16 VMEM scratch and
    reused across the N tiles of the same row tile.
    """
    inv_sqrt2 = 1.0 / math.sqrt(2.0)

    def kernel(*refs):
        idx = 0
        x_ref = refs[idx]; idx += 1
        if has_ln:
            g_ref, bt_ref = refs[idx], refs[idx + 1]; idx += 2
        w_ref, b_ref = refs[idx], refs[idx + 1]; idx += 2
        r_ref = None
        if has_res:
            r_ref = refs[idx]; idx += 1
        o_ref = refs[idx]; idx += 1
        acc_ref = None
        if multi_k:
            acc_ref = refs[idx]; idx += 1
        xn_ref = None
        if use_ln_cache:
            xn_ref = refs[idx]; idx += 1

        def layernorm_bf16():
            xf = x_ref[...].astype(jnp.float32)
            mu = jnp.mean(xf, axis=-1, keepdims=True)
            xc = xf - mu
            var = jnp.mean(xc * xc, axis=-1, keepdims=True)   # biased, as torch LayerNorm
            y = (xc * jax.lax.rsqrt(var + eps) * g_ref[...].astype(jnp.float32)
                 + bt_ref[...].astype(jnp.float32))
            return y.astype(jnp.bfloat16)

        if has_ln:
            if use_ln_cache:
                @pl.when(pl.program_id(1) == 0)
                def _():
                    xn_ref[...] = layernorm_bf16()
                xb = xn_ref[...]
            else:
                xb = layernorm_bf16()
        else:
            xb = x_ref[...].astype(jnp.bfloat16)

        part = jnp.dot(xb, w_ref[...].astype(jnp.bfloat16),
                       preferred_element_type=jnp.float32)

        def epilogue(acc):
            y = acc + b_ref[...].astype(jnp.float32)
            if activation == 'gelu':          # exact erf GELU (torch nn.GELU default)
                y = 0.5 * y * (1.0 + jax.lax.erf(y * inv_sqrt2))
            elif activation == 'gelu_tanh':   # tanh approximation (EUP path)
                y = jax.nn.gelu(y, approximate=True)
            if has_res:
                y = y + r_ref[...].astype(jnp.float32)
            o_ref[...] = y.astype(o_ref.dtype)

        if multi_k:
            k = pl.program_id(2)
            nk = pl.num_programs(2)

            @pl.when(k == 0)
            def _():
                acc_ref[...] = part

            @pl.when(jnp.logical_and(k > 0, k < nk - 1))
            def _():
                acc_ref[...] += part

            @pl.when(k == nk - 1)
            def _():
                epilogue(acc_ref[...] + part)
        else:
            epilogue(part)

    return kernel


def linear(x, w, b, *, ln=None, residual=None, activation=None,
           out_dtype=jnp.bfloat16, eps=1e-6):
    """x: (M, K), w: (K, N) [bf16], b: (1, N) -> (M, N).

    Optional fused: LayerNorm prologue (`ln=(gamma, beta)`, each (1, K)), GELU epilogue
    (`activation='gelu'|'gelu_tanh'`), residual add (`residual`: (M, N)).
    """
    M, K = x.shape
    N = w.shape[1]
    has_ln = ln is not None
    has_res = residual is not None

    # Row tiling (the residual stream is padded once in the forward, so Mp == M there).
    tm, Mp = _pick_row_tile(M)

    # Column tile: lane-dense tiles whenever N is 128-aligned (params are padded so it is).
    if N % 512 == 0:
        tn = 512
    elif N % 256 == 0:
        tn = 256
    elif N % 128 == 0:
        tn = 128
    else:
        tn = N
    nn = N // tn

    # K tile: split only when no LN fusion (LN needs the whole row visible).
    tk = K
    if not has_ln:
        for c in (512, 256, 128):
            if K % c == 0:
                tk = c
                break
    nk = K // tk
    multi_k = nk > 1
    use_ln_cache = has_ln and nn > 1

    inputs = [_pad_rows(x, Mp)]
    in_specs = [pl.BlockSpec((tm, tk), lambda i, j, k: (i, k))]
    if has_ln:
        g, bt = ln
        inputs += [g, bt]
        in_specs += [pl.BlockSpec((1, K), lambda i, j, k: (0, 0)),
                     pl.BlockSpec((1, K), lambda i, j, k: (0, 0))]
    inputs += [w, b]
    in_specs += [pl.BlockSpec((tk, tn), lambda i, j, k: (k, j)),
                 pl.BlockSpec((1, tn), lambda i, j, k: (0, j))]
    if has_res:
        inputs.append(_pad_rows(residual, Mp))
        in_specs.append(pl.BlockSpec((tm, tn), lambda i, j, k: (i, j)))

    scratch = []
    if multi_k:
        scratch.append(pltpu.VMEM((tm, tn), jnp.float32))
    if use_ln_cache:
        scratch.append(pltpu.VMEM((tm, K), jnp.bfloat16))

    # When the LN cache is live, the N axis must iterate sequentially per row tile so the
    # cache computed at j == 0 is always valid (row tiles remain parallel across cores).
    dim_sem = ("parallel", "arbitrary" if use_ln_cache else "parallel", "arbitrary")

    out = pl.pallas_call(
        _make_linear_kernel(has_ln, has_res, activation, eps, multi_k, use_ln_cache),
        out_shape=jax.ShapeDtypeStruct((Mp, N), out_dtype),
        grid=(Mp // tm, nn, nk),
        in_specs=in_specs,
        out_specs=pl.BlockSpec((tm, tn), lambda i, j, k: (i, j)),
        scratch_shapes=scratch,
        compiler_params=pltpu.CompilerParams(dimension_semantics=dim_sem),
    )(*inputs)
    return out if Mp == M else out[:M]


# --------------------------- attention kernel ---------------------------------

def _attn_kernel(qkv_ref, o_ref, *, num_heads, true_t):
    """qkv_ref: (1, Tp, 3*D) packed [q | k | v] (head-major within each).  o_ref: (1, Tp, D).

    Static loop over heads inside one program (qkv split / output assembly stay in VMEM).
    The qk scale is pre-folded into the q projection weights.  Padded key rows (>= true_t)
    are masked out so the once-padded token axis never corrupts real tokens.  Per-head
    outputs are concatenated and written with a single lane-dense store.
    """
    Tp = o_ref.shape[1]
    D = o_ref.shape[2]
    Dh = D // num_heads
    key_ok = jax.lax.broadcasted_iota(jnp.int32, (Tp, Tp), 1) < true_t
    neg = jnp.float32(-1e30)

    outs = []
    for h in range(num_heads):
        q = qkv_ref[0, :, h * Dh:(h + 1) * Dh]                      # bf16, already scaled
        k = qkv_ref[0, :, D + h * Dh:D + (h + 1) * Dh]
        v = qkv_ref[0, :, 2 * D + h * Dh:2 * D + (h + 1) * Dh]
        s = jax.lax.dot_general(q, k, (((1,), (1,)), ((), ())),
                                preferred_element_type=jnp.float32)  # (Tp, Tp)
        s = jnp.where(key_ok, s, neg)
        s = s - jnp.max(s, axis=-1, keepdims=True)
        p = jnp.exp(s)
        p = p * pl.reciprocal(jnp.sum(p, axis=-1, keepdims=True), approx=True)
        outs.append(jnp.dot(p.astype(jnp.bfloat16), v, preferred_element_type=jnp.float32))
    o_ref[0] = jnp.concatenate(outs, axis=-1).astype(o_ref.dtype)


def attention(qkv3, num_heads, true_t):
    """qkv3: (B, Tp, 3*D) -> (B, Tp, D).  One program per batch element."""
    # TODO(synk): on v7x, add a second parallel grid axis over heads (q/k/v views of qkv3 via
    # separate index_maps) so both TensorCores stay busy when B is 1 or odd.
    B, Tp, threeD = qkv3.shape
    D = threeD // 3
    return pl.pallas_call(
        functools.partial(_attn_kernel, num_heads=num_heads, true_t=true_t),
        out_shape=jax.ShapeDtypeStruct((B, Tp, D), jnp.bfloat16),
        grid=(B,),
        in_specs=[pl.BlockSpec((1, Tp, threeD), lambda i: (i, 0, 0))],
        out_specs=pl.BlockSpec((1, Tp, D), lambda i: (i, 0, 0)),
        compiler_params=pltpu.CompilerParams(dimension_semantics=("parallel",)),
    )(qkv3)


# --------------------------- Model (glue + kernels) ---------------------------

def trunc_normal(key, shape, std):
    # matches trunc_normal_(t, std=s) with a=-s, b=s
    return std * jax.random.truncated_normal(key, -1.0, 1.0, shape, jnp.float32)


def init_params(key, *, in_chans, embed_dim, depth, num_heads, mlp_ratio,
                num_patches, codebook_size, codebook_num, init_std=0.02, qk_scale=None):
    hidden = embed_dim * mlp_ratio
    n_keys = 6 + depth * 4                      # exact number of trunc_normal draws
    keys = iter(jax.random.split(key, n_keys))
    ones_d = jnp.ones((1, embed_dim), jnp.float32)
    zeros_d = jnp.zeros((1, embed_dim), jnp.float32)

    head_dim = embed_dim // num_heads
    scale = qk_scale if qk_scale is not None else head_dim ** -0.5

    n_logits = codebook_size * codebook_num
    n_logits_pad = _round_up(n_logits, 128)     # lane-dense lm_head output; slice logits later
    lm_w = trunc_normal(next(keys := keys, None) if False else next(keys),
                        (embed_dim, n_logits), init_std)
    lm_w = jnp.pad(lm_w, ((0, 0), (0, n_logits_pad - n_logits)))

    p = {
        # PatchEmbed: Conv2d(in_chans, embed_dim, kernel=1, stride=1) == linear over channels
        'patch_w': trunc_normal(next(keys), (in_chans, embed_dim), init_std).astype(jnp.bfloat16),
        'patch_b': jnp.zeros((1, embed_dim), jnp.float32),
        'cls_token': trunc_normal(next(keys), (1, 1, embed_dim), init_std),
        'mask_token': trunc_normal(next(keys), (1, 1, embed_dim), init_std),
        'hist_token': trunc_normal(next(keys), (1, 1, embed_dim), init_std),
        'pos_embed': trunc_normal(next(keys), (1, num_patches + 2, embed_dim), init_std),
        'norm_g': ones_d, 'norm_b': zeros_d,
        'lm_head_w': lm_w.astype(jnp.bfloat16),
        'lm_head_b': jnp.zeros((1, n_logits_pad), jnp.float32),
    }
    # NOTE: lm_head weight key was consumed above (key order unchanged vs. torch init order).

    blocks = []
    for layer_id in range(1, depth + 1):
        rescale = 1.0 / math.sqrt(2.0 * layer_id)   # fix_init_weight()
        qkv_w = trunc_normal(next(keys), (embed_dim, 3 * embed_dim), init_std)
        # fold the attention qk scale into the q projection (weights AND bias; bias is zero):
        qkv_w = qkv_w.at[:, :embed_dim].multiply(scale)
        blk = {
            'ln1_g': ones_d, 'ln1_b': zeros_d,
            # BEiT qkv: q/v biases learned (init 0), k bias fixed 0 -> all-zero bias vector
            'qkv_w': qkv_w.astype(jnp.bfloat16),
            'qkv_b': jnp.zeros((1, 3 * embed_dim), jnp.float32),
            'proj_w': (trunc_normal(next(keys), (embed_dim, embed_dim), init_std)
                       * rescale).astype(jnp.bfloat16),
            'proj_b': zeros_d,
            'ln2_g': ones_d, 'ln2_b': zeros_d,
            'fc1_w': trunc_normal(next(keys), (embed_dim, hidden), init_std).astype(jnp.bfloat16),
            'fc1_b': jnp.zeros((1, hidden), jnp.float32),
            'fc2_w': (trunc_normal(next(keys), (hidden, embed_dim), init_std)
                      * rescale).astype(jnp.bfloat16),
            'fc2_b': zeros_d,
        }
        blocks.append(blk)
    p['blocks'] = blocks
    return p


def block_forward(p, x, num_heads, true_t):
    """Pre-norm ViT block: x + Attn(LN1(x)); x + MLP(LN2(x)).  (drop_path/dropout = identity)"""
    B, Tp, D = x.shape
    x2d = x.reshape(B * Tp, D)

    # LN1 fused into the qkv projection
    qkv = linear(x2d, p['qkv_w'], p['qkv_b'], ln=(p['ln1_g'], p['ln1_b']))   # (B*Tp, 3D)
    attn = attention(qkv.reshape(B, Tp, 3 * D), num_heads, true_t)            # (B, Tp, D)
    # output projection with fused residual add
    x2d = linear(attn.reshape(B * Tp, D), p['proj_w'], p['proj_b'], residual=x2d)

    # LN2 + fc1 + GELU fused; fc2 with fused residual add
    act = 'gelu_tanh' if GELU_APPROX_TANH else 'gelu'
    f = linear(x2d, p['fc1_w'], p['fc1_b'], ln=(p['ln2_g'], p['ln2_b']), activation=act)
    x2d = linear(f, p['fc2_w'], p['fc2_b'], residual=x2d)
    return x2d.reshape(B, Tp, D)


def vit_mim_forward(params, x_nchw, bool_masked_pos, masked_idx, *, num_heads, num_logits):
    """Equivalent of VisionTransformerMIM.forward(x, bool_masked_pos) default path:
    returns lm_head(norm(x)[:, 2:][bool_masked_pos])."""
    B, Cin, H, W = x_nchw.shape
    D = params['pos_embed'].shape[-1]
    N = H * W
    T = N + 2
    Tp = _round_up(T, 128)   # pad the token axis ONCE; padded keys are masked in attention

    # PatchEmbed (1x1 conv == per-pixel linear), row-major patch order as torch flatten(2)
    xp = jnp.transpose(x_nchw, (0, 2, 3, 1)).reshape(B * N, Cin)
    x = linear(xp, params['patch_w'], params['patch_b']).reshape(B, N, D)    # bf16

    # mask-token replacement + cls/hist tokens + abs pos embed, all in bf16 (pos_drop = identity)
    m = bool_masked_pos[..., None]
    x = jnp.where(m, params['mask_token'].astype(jnp.bfloat16), x)
    cls = jnp.broadcast_to(params['cls_token'], (B, 1, D)).astype(jnp.bfloat16)
    hist = jnp.broadcast_to(params['hist_token'], (B, 1, D)).astype(jnp.bfloat16)
    x = jnp.concatenate([cls, hist, x], axis=1) + params['pos_embed'].astype(jnp.bfloat16)
    x = jnp.pad(x, ((0, 0), (0, Tp - T), (0, 0)))                            # (B, Tp, D)

    for blk in params['blocks']:
        x = block_forward(blk, x, num_heads, true_t=T)

    # forward(): drop cls (x[:,0]) / hist (x[:,1]) and padded rows; gather masked patch rows;
    # the final LayerNorm is row-wise, so it is fused into the lm_head matmul of only those rows.
    patches = x[:, 2:T, :].reshape(B * N, D)
    # TODO(synk): torch `x[bool_masked_pos]` is a data-dependent-shape boolean gather; the mask
    # is host-static here, so we gather with precomputed flat indices (same values, same order).
    masked_tokens = patches[masked_idx]
    logits = linear(masked_tokens, params['lm_head_w'], params['lm_head_b'],
                    ln=(params['norm_g'], params['norm_b']), out_dtype=jnp.float32)
    return logits[:, :num_logits]


# ------------------------------- demo ----------------------------------------

if __name__ == "__main__":
    # small, self-consistent config
    B = 2
    in_chans = 16
    input_res = 8           # patch_size = 1 -> num_patches = 64
    embed_dim = 128
    depth = 2
    num_heads = 4
    mlp_ratio = 4
    codebook_size = 16
    codebook_num = 3
    num_patches = input_res * input_res
    num_logits = codebook_size * codebook_num

    key = jax.random.PRNGKey(0)
    kx, kp = jax.random.split(key)
    x = jax.random.normal(kx, (B, in_chans, input_res, input_res), jnp.float32)

    # deterministic boolean mask: first 5 patches of each image are masked
    mask_np = np.zeros((B, num_patches), dtype=bool)
    mask_np[:, :5] = True
    bool_masked_pos = jnp.asarray(mask_np)
    masked_idx = jnp.asarray(np.nonzero(mask_np.reshape(-1))[0], dtype=jnp.int32)

    params = init_params(
        kp, in_chans=in_chans, embed_dim=embed_dim, depth=depth,
        num_heads=num_heads, mlp_ratio=mlp_ratio, num_patches=num_patches,
        codebook_size=codebook_size, codebook_num=codebook_num, init_std=0.02)

    out = vit_mim_forward(params, x, bool_masked_pos, masked_idx,
                          num_heads=num_heads, num_logits=num_logits)
    out = jax.block_until_ready(out)

    n_masked = int(mask_np.sum())
    assert out.shape == (n_masked, num_logits), out.shape
    assert bool(jnp.all(jnp.isfinite(out)))
    print("KERNEL_OK")
</pallas_src>

<mosaic_0001>
module attributes {stable_mosaic.version = 11 : i64} {
  func.func @kernel(%arg0: i32, %arg1: i32, %arg2: i32, %arg3: memref<128x16xf32, #tpu.memory_space<vmem>>, %arg4: memref<16x128xbf16, #tpu.memory_space<vmem>>, %arg5: memref<1x128xf32, #tpu.memory_space<vmem>>, %arg6: memref<128x128xbf16, #tpu.memory_space<vmem>>) attributes {dimension_semantics = [#tpu.dimension_semantics<parallel>, #tpu.dimension_semantics<parallel>, #tpu.dimension_semantics<arbitrary>], iteration_bounds = array<i64: 1, 1, 1>, scalar_prefetch = 0 : i64, scratch_operands = 0 : i64, tpu.core_type = #tpu.core_type<tc>, window_params = [{transform_indices = @transform_0, window_bounds = array<i64: 128, 16>}, {transform_indices = @transform_1, window_bounds = array<i64: 16, 128>}, {transform_indices = @transform_2, window_bounds = array<i64: 1, 128>}, {transform_indices = @transform_3, window_bounds = array<i64: 128, 128>}]} {
    %c0 = arith.constant 0 : index
    %c0_0 = arith.constant 0 : index
    %0 = vector.load %arg3[%c0, %c0_0] : memref<128x16xf32, #tpu.memory_space<vmem>>, vector<128x16xf32>
    %1 = arith.truncf %0 : vector<128x16xf32> to vector<128x16xbf16>
    %c0_1 = arith.constant 0 : index
    %c0_2 = arith.constant 0 : index
    %2 = vector.load %arg4[%c0_1, %c0_2] : memref<16x128xbf16, #tpu.memory_space<vmem>>, vector<16x128xbf16>
    %cst = arith.constant dense<0.000000e+00> : vector<128x128xf32>
    %3 = tpu.matmul %1, %2, %cst {dimension_numbers = #tpu.dot_dimension_numbers<[1], [0], [0], [1], [0, 0, 1, 1], [], []>} : vector<128x16xbf16>, vector<16x128xbf16>, vector<128x128xf32> -> vector<128x128xf32>
    %c0_3 = arith.constant 0 : index
    %c0_4 = arith.constant 0 : index
    %4 = vector.load %arg5[%c0_3, %c0_4] : memref<1x128xf32, #tpu.memory_space<vmem>>, vector<1x128xf32>
    %5 = vector.broadcast %4 : vector<1x128xf32> to vector<128x128xf32>
    %6 = arith.addf %3, %5 : vector<128x128xf32>
    %7 = arith.truncf %6 : vector<128x128xf32> to vector<128x128xbf16>
    %c0_5 = arith.constant 0 : index
    %c0_6 = arith.constant 0 : index
    %8 = vector.load %arg6[%c0_5, %c0_6] : memref<128x128xbf16, #tpu.memory_space<vmem>>, vector<128x128xbf16>
    tpu.vector_store %arg6[%c0_5, %c0_6], %7 {strides = array<i32>} : memref<128x128xbf16, #tpu.memory_space<vmem>>, vector<128x128xbf16>,
    return
  }
  func.func @transform_0(%arg0: i32, %arg1: i32, %arg2: i32) -> (i32, i32) {
    %c0_i32 = arith.constant 0 : i32
    return %arg0, %arg2 : i32, i32
  }
  func.func @transform_1(%arg0: i32, %arg1: i32, %arg2: i32) -> (i32, i32) {
    %c0_i32 = arith.constant 0 : i32
    return %arg2, %arg1 : i32, i32
  }
  func.func @transform_2(%arg0: i32, %arg1: i32, %arg2: i32) -> (i32, i32) {
    %c0_i32 = arith.constant 0 : i32
    %c0_i32_0 = arith.constant 0 : i32
    return %c0_i32, %arg1 : i32, i32
  }
  func.func @transform_3(%arg0: i32, %arg1: i32, %arg2: i32) -> (i32, i32) {
    %c0_i32 = arith.constant 0 : i32
    return %arg0, %arg1 : i32, i32
  }
}

</mosaic_0001>

<llo_original>
// kernel: tpu_custom_call.1
$region0: #{tpu_custom_call.1}
  #allocation0 [shape = 'u32[]', space=smem, size = 0x4, offset = 0x4, fixed_abs, tag = 'smem constant byte address 0x4 - core index']
  #allocation1 [shape = 'u32[144,128]{1,0:T(1,128)}', space=vmem, size = 0x12000, scoped, tag = 'internal scratch']
  %s0 = inlined_call_operand.vmem [shape: f32[128,16], index: 0, kind: input, shape index: {}]
  %s1 = inlined_call_operand.vmem [shape: bf16[16,128], index: 1, kind: input, shape index: {}]
  %s2 = inlined_call_operand.vmem [shape: f32[1,128], index: 2, kind: input, shape index: {}]
  %s3 = inlined_call_operand.hbm [shape: bf16[128,128], index: 3, kind: output, shape index: {}]
  %s4 = sld [smem:[#allocation0]]
  $region22: #{tpu_custom_call.1} parent=0
    _
  %s6 = ssub.s32 1, %s4
  %s7 = scalar_select 0, %s6, %s4
  $region1: #{tpu_custom_call.1} parent=0
    #allocation2 [shape = 'u8[32768]{0}', space=vmem, size = 0x8000, scoped, tag = 'output window, operand 0, single buffered']
    #allocation3 [shape = 's32[1]{0}', space=sflag, size = 0x4, scoped, tag = 'scoped memory for tpu_custom_call.1']
    %8 = vsyncpa [#allocation3], 0
    // Predicated region
    $region2: #{tpu_custom_call.1} parent=1 // pred_check
      _
    $region3: #{tpu_custom_call.1} parent=1 // pred_check_branch
      %10 = sbr.rel (0) target = $region5
    $region4: #{tpu_custom_call.1} parent=1 // pred_region
      _
    $region5: #{tpu_custom_call.1} parent=1 // pred_fallthru
      _
    // Predicated region
    $region6: #{tpu_custom_call.1} parent=1 // pred_check
      _
    $region7: #{tpu_custom_call.1} parent=1 // pred_check_branch
      %12 = sbr.rel (0) target = $region9
    $region8: #{tpu_custom_call.1} parent=1 // pred_region
      _
    $region9: #{tpu_custom_call.1} parent=1 // pred_fallthru
      _
    // Predicated region
    $region10: #{tpu_custom_call.1} parent=1 // pred_check
      _
    $region11: #{tpu_custom_call.1} parent=1 // pred_check_branch
      %14 = sbr.rel (0) target = $region13
    $region12: #{tpu_custom_call.1} parent=1 // pred_region
      _
    $region13: #{tpu_custom_call.1} parent=1 // pred_fallthru
      _
    %v16 = vld [vmem:[%s0] sm:$0xff]
    %v17 = vld [vmem:[%s0 + $0x8] sm:$0xff]
    %v18 = vld [vmem:[%s0 + $0x10] sm:$0xff]
    %v19 = vld [vmem:[%s0 + $0x18] sm:$0xff]
    %v20 = vld [vmem:[%s0 + $0x20] sm:$0xff]
    %v21 = vld [vmem:[%s0 + $0x28] sm:$0xff]
    %v22 = vld [vmem:[%s0 + $0x30] sm:$0xff]
    %v23 = vld [vmem:[%s0 + $0x38] sm:$0xff]
    %v24 = vld [vmem:[%s0 + $0x40] sm:$0xff]
    %v25 = vld [vmem:[%s0 + $0x48] sm:$0xff]
    %v26 = vld [vmem:[%s0 + $0x50] sm:$0xff]
    %v27 = vld [vmem:[%s0 + $0x58] sm:$0xff]
    %v28 = vld [vmem:[%s0 + $0x60] sm:$0xff]
    %v29 = vld [vmem:[%s0 + $0x68] sm:$0xff]
    %v30 = vld [vmem:[%s0 + $0x70] sm:$0xff]
    %v31 = vld [vmem:[%s0 + $0x78] sm:$0xff]
    %v32 = vpack.c.bf16 %v17, %v16
    %v33 = vpack.c.bf16 %v19, %v18
    %v34 = vpack.c.bf16 %v21, %v20
    %v35 = vpack.c.bf16 %v23, %v22
    %v36 = vpack.c.bf16 %v25, %v24
    %v37 = vpack.c.bf16 %v27, %v26
    %v38 = vpack.c.bf16 %v29, %v28
    %v39 = vpack.c.bf16 %v31, %v30
    %v40 = vld [vmem:[%s1] sm:$0xf]
    %v41 = vld [vmem:[%s1 + $0x4] sm:$0xf]
    %v42 = vld [vmem:[%s2] sm:$0x1]
    %v44 = vlaneseq
    %v45 = vshrl.u32 %v44, 7
    %v46 = vsub.s32 0, %v45
    %v47 = vrot.slane %v42, %v46
    %v51 = vunpack.c.l.b16 %v40
    %v52 = vunpack.c.l.b16 %v41
    %v53 = vpack.c.b16 %v52, %v51
    %vm55 = vcmask 130048
    %v57 = vsel %vm55, %v32, 0
    %v60 = vsel %vm55, %v33, 0
    %v63 = vsel %vm55, %v34, 0
    %v66 = vsel %vm55, %v35, 0
    %v69 = vsel %vm55, %v36, 0
    %v72 = vsel %vm55, %v37, 0
    %v75 = vsel %vm55, %v38, 0
    %v78 = vsel %vm55, %v39, 0
    %80 = vmatprep.subr.bf16.mxu0 0
    %81 = vmatpush1.bf16.msra.mxu0 %v53
    %82 = vmatprep.subr.bf16.mxu0 0
    %83 = vmatpush1.bf16.msra.mxu0 0
    %84 = vmatprep.subr.bf16.mxu0 0
    %85 = vmatpush1.bf16.msra.mxu0 0
    %86 = vmatprep.subr.bf16.mxu0 0
    %87 = vmatpush1.bf16.msra.mxu0 0
    %88 = vmatprep.subr.bf16.mxu0 0
    %89 = vmatpush1.bf16.msra.mxu0 0
    %90 = vmatprep.subr.bf16.mxu0 0
    %91 = vmatpush1.bf16.msra.mxu0 0
    %92 = vmatprep.subr.bf16.mxu0 0
    %93 = vmatpush1.bf16.msra.mxu0 0
    %94 = vmatprep.subr.bf16.mxu0 0
    %95 = vmatpush1.bf16.msra.mxu0 0
    %96 = vmatprep.subr.bf16.mxu0 0
    %97 = vmatpush1.bf16.msra.mxu0 0
    %98 = vmatprep.subr.bf16.mxu0 0
    %99 = vmatpush1.bf16.msra.mxu0 0
    %100 = vmatprep.subr.bf16.mxu0 0
    %101 = vmatpush1.bf16.msra.mxu0 0
    %102 = vmatprep.subr.bf16.mxu0 0
    %103 = vmatpush1.bf16.msra.mxu0 0
    %104 = vmatprep.subr.bf16.mxu0 0
    %105 = vmatpush1.bf16.msra.mxu0 0
    %106 = vmatprep.subr.bf16.mxu0 0
    %107 = vmatpush1.bf16.msra.mxu0 0
    %108 = vmatprep.subr.bf16.mxu0 0
    %109 = vmatpush1.bf16.msra.mxu0 0
    %110 = vmatprep.subr.bf16.mxu0 0
    %111 = vmatpush1.bf16.msra.mxu0 0
    %112 = vmatprep.mubr.bf16.mxu0 0
    %113 = vmatmul.mubr.bf16.gmra.mrb[0].mxu0 %v57
    %v114 = vpop.f32.mrb[0].mxu0
    %v115 = vadd.f32 %v47, %v114
    %v116 = vpop.f32.mrb[0].mxu0
    %v117 = vpop.f32.mrb[0].mxu0
    %v118 = vadd.f32 %v47, %v117
    %v119 = vpop.f32.mrb[0].mxu0
    %120 = vmatprep.mubr.bf16.mxu0 0
    %121 = vmatmul.mubr.bf16.gmra.mrb[0].mxu0 %v60
    %v122 = vpop.f32.mrb[0].mxu0
    %v123 = vadd.f32 %v47, %v122
    %v124 = vpop.f32.mrb[0].mxu0
    %v125 = vpop.f32.mrb[0].mxu0
    %v126 = vadd.f32 %v47, %v125
    %v127 = vpop.f32.mrb[0].mxu0
    %128 = vmatprep.mubr.bf16.mxu0 0
    %129 = vmatmul.mubr.bf16.gmra.mrb[0].mxu0 %v63
    %v130 = vpop.f32.mrb[0].mxu0
    %v131 = vadd.f32 %v47, %v130
    %v132 = vpop.f32.mrb[0].mxu0
    %v133 = vpop.f32.mrb[0].mxu0
    %v134 = vadd.f32 %v47, %v133
    %v135 = vpop.f32.mrb[0].mxu0
    %136 = vmatprep.mubr.bf16.mxu0 0
    %137 = vmatmul.mubr.bf16.gmra.mrb[0].mxu0 %v66
    %v138 = vpop.f32.mrb[0].mxu0
    %v139 = vadd.f32 %v47, %v138
    %v140 = vpop.f32.mrb[0].mxu0
    %v141 = vpop.f32.mrb[0].mxu0
    %v142 = vadd.f32 %v47, %v141
    %v143 = vpop.f32.mrb[0].mxu0
    %144 = vmatprep.mubr.bf16.mxu0 0
    %145 = vmatmul.mubr.bf16.gmra.mrb[0].mxu0 %v69
    %v146 = vpop.f32.mrb[0].mxu0
    %v147 = vadd.f32 %v47, %v146
    %v148 = vpop.f32.mrb[0].mxu0
    %v149 = vpop.f32.mrb[0].mxu0
    %v150 = vadd.f32 %v47, %v149
    %v151 = vpop.f32.mrb[0].mxu0
    %152 = vmatprep.mubr.bf16.mxu0 0
    %153 = vmatmul.mubr.bf16.gmra.mrb[0].mxu0 %v72
    %v154 = vpop.f32.mrb[0].mxu0
    %v155 = vadd.f32 %v47, %v154
    %v156 = vpop.f32.mrb[0].mxu0
    %v157 = vpop.f32.mrb[0].mxu0
    %v158 = vadd.f32 %v47, %v157
    %v159 = vpop.f32.mrb[0].mxu0
    %160 = vmatprep.mubr.bf16.mxu0 0
    %161 = vmatmul.mubr.bf16.gmra.mrb[0].mxu0 %v75
    %v162 = vpop.f32.mrb[0].mxu0
    %v163 = vadd.f32 %v47, %v162
    %v164 = vpop.f32.mrb[0].mxu0
    %v165 = vpop.f32.mrb[0].mxu0
    %v166 = vadd.f32 %v47, %v165
    %v167 = vpop.f32.mrb[0].mxu0
    %168 = vmatprep.mubr.bf16.mxu0 0
    %169 = vmatmul.mubr.bf16.gmra.mrb[0].mxu0 %v78
    %v170 = vpop.f32.mrb[0].mxu0
    %v171 = vadd.f32 %v47, %v170
    %v172 = vpop.f32.mrb[0].mxu0
    %v173 = vpop.f32.mrb[0].mxu0
    %v174 = vadd.f32 %v47, %v173
    %v175 = vpop.f32.mrb[0].mxu0
    %176 = vdwg.mxu0
    %v177 = vpack.c.bf16 %v118, %v115
    %v178 = vpack.c.bf16 %v126, %v123
    %v179 = vpack.c.bf16 %v134, %v131
    %v180 = vpack.c.bf16 %v142, %v139
    %v181 = vpack.c.bf16 %v150, %v147
    %v182 = vpack.c.bf16 %v158, %v155
    %v183 = vpack.c.bf16 %v166, %v163
    %v184 = vpack.c.bf16 %v174, %v171
    %v193 = vunpack.c.l.b16 %v177
    %v194 = vunpack.c.h.b16 %v177
    %v195 = vunpack.c.l.b16 %v178
    %v196 = vunpack.c.h.b16 %v178
    %v197 = vunpack.c.l.b16 %v179
    %v198 = vunpack.c.h.b16 %v179
    %v199 = vunpack.c.l.b16 %v180
    %v200 = vunpack.c.h.b16 %v180
    %v201 = vunpack.c.l.b16 %v181
    %v202 = vunpack.c.h.b16 %v181
    %v203 = vunpack.c.l.b16 %v182
    %v204 = vunpack.c.h.b16 %v182
    %v205 = vunpack.c.l.b16 %v183
    %v206 = vunpack.c.h.b16 %v183
    %v207 = vunpack.c.l.b16 %v184
    %v208 = vunpack.c.h.b16 %v184
    %v209 = vpack.c.b16 %v193, %v193
    %v210 = vpack.c.b16 %v194, %v194
    %v211 = vpack.c.b16 %v195, %v195
    %v212 = vpack.c.b16 %v196, %v196
    %v213 = vpack.c.b16 %v197, %v197
    %v214 = vpack.c.b16 %v198, %v198
    %v215 = vpack.c.b16 %v199, %v199
    %v216 = vpack.c.b16 %v200, %v200
    %v217 = vpack.c.b16 %v201, %v201
    %v218 = vpack.c.b16 %v202, %v202
    %v219 = vpack.c.b16 %v203, %v203
    %v220 = vpack.c.b16 %v204, %v204
    %v221 = vpack.c.b16 %v205, %v205
    %v222 = vpack.c.b16 %v206, %v206
    %v223 = vpack.c.b16 %v207, %v207
    %v224 = vpack.c.b16 %v208, %v208
    %241 = vst [vmem:[#allocation2] sm:$0xf] %v209
    %242 = vst [vmem:[#allocation2 + $0x4] sm:$0xf] %v210
    %243 = vst [vmem:[#allocation2 + $0x8] sm:$0xf] %v211
    %244 = vst [vmem:[#allocation2 + $0xc] sm:$0xf] %v212
    %245 = vst [vmem:[#allocation2 + $0x10] sm:$0xf] %v213
    %246 = vst [vmem:[#allocation2 + $0x14] sm:$0xf] %v214
    %247 = vst [vmem:[#allocation2 + $0x18] sm:$0xf] %v215
    %248 = vst [vmem:[#allocation2 + $0x1c] sm:$0xf] %v216
    %249 = vst [vmem:[#allocation2 + $0x20] sm:$0xf] %v217
    %250 = vst [vmem:[#allocation2 + $0x24] sm:$0xf] %v218
    %251 = vst [vmem:[#allocation2 + $0x28] sm:$0xf] %v219
    %252 = vst [vmem:[#allocation2 + $0x2c] sm:$0xf] %v220
    %253 = vst [vmem:[#allocation2 + $0x30] sm:$0xf] %v221
    %254 = vst [vmem:[#allocation2 + $0x34] sm:$0xf] %v222
    %255 = vst [vmem:[#allocation2 + $0x38] sm:$0xf] %v223
    %256 = vst [vmem:[#allocation2 + $0x3c] sm:$0xf] %v224
    // Predicated region
    $region14: #{tpu_custom_call.1} parent=1 // pred_check
      _
    $region15: #{tpu_custom_call.1} parent=1 // pred_check_branch
      %258 = sbr.rel (0) target = $region17
    $region16: #{tpu_custom_call.1} parent=1 // pred_region
      %s260 = ssub.s32 1024, 1024
      %261 = vsyncadd [#allocation3], %s260
      %s262 = sshll.u32 [#allocation2], 4
      %s263 = int_to_ptr.vmem [resolvable:$true] %s262
      %268 = dma.vmem_to_hbm [thread:$0]  %s263, 1024, %s3, [#allocation3], 64, 64, 4
    $region17: #{tpu_custom_call.1} parent=1 // pred_fallthru
      _
    // Predicated region
    $region18: #{tpu_custom_call.1} parent=1 // pred_check
      _
    $region19: #{tpu_custom_call.1} parent=1 // pred_check_branch
      %270 = sbr.rel (0) target = $region21
    $region20: #{tpu_custom_call.1} parent=1 // pred_region
      %271 = dma.done [#allocation3], 1024
    $region21: #{tpu_custom_call.1} parent=1 // pred_fallthru
      _
    %272 = vsyncpa [#allocation3], 1

</llo_original>
